<compile_context>
chip_gen: v6e
topology: v6e:2x2x1
jax: 0.10.0
libtpu: 0.0.40
codegen_flags: <defaults>
</compile_context>

<pallas_src>
import jax
import jax.numpy as jnp
from jax.experimental import pallas as pl
from jax.experimental.pallas import tpu as pltpu


def _make_kernel(inv_hw):
    def kernel(x_ref, wc_ref, bc_ref, w1_ref, b1_ref, w2_ref, b2_ref, out_ref):
        """Fused pooled-backbone + age head, one multi-image block per grid step.

        x_ref : [Bt, C_in, H*W]  flattened NCHW images (lane-dense last dim)   VMEM
        wc_ref: [C_in, C_feat]   bc_ref: [1, C_feat]                            VMEM
        w1_ref: [C_feat, HID]    b1_ref: [1, HID]                               VMEM
        w2_ref: [1, HID]         b2_ref: [1]                                    SMEM
        out_ref: [1, 1, Bt]      per-block ages, batch on the lane axis         VMEM
        """
        # Global average pool over the flattened spatial axis: VPU vreg adds along
        # lanes + a single XLU cross-lane reduce per block. f32 accumulation even if
        # the input is bf16.
        x = x_ref[...].astype(jnp.float32)                               # [Bt, C_in, HW]
        pooled = jnp.sum(x, axis=2) * inv_hw                             # [Bt, C_in]

        # 1x1 pointwise "backbone" projection, commuted after the pool (exact: linear).
        fproj = jnp.dot(pooled, wc_ref[...],
                        preferred_element_type=jnp.float32) + bc_ref[...]  # [Bt, C_feat]

        # age_head: Linear(C_feat, HID) -> ReLU -> Linear(HID, 1), batched over Bt.
        h = jnp.dot(fproj, w1_ref[...],
                    preferred_element_type=jnp.float32) + b1_ref[...]      # [Bt, HID]
        h = jnp.maximum(h, 0.0)
        # Final Linear(HID, 1): VPU multiply + lane reduce (no N=1 MXU matmul).
        age = jnp.sum(h * w2_ref[...], axis=-1) + b2_ref[0]                # [Bt]

        out_ref[...] = age.reshape(1, 1, -1).astype(out_ref.dtype)         # lane-dense store

    return kernel


def _pick_batch_tile(batch, bytes_per_image, vmem_budget_bytes):
    """Largest divisor of `batch` whose double-buffered x stream fits the VMEM budget.

    When batch >= 2 we also keep at least 2 grid blocks so v7x's two TensorCores
    both get work (negligible cost on single-core v5e/v6e).
    """
    max_bt = max(1, vmem_budget_bytes // (2 * bytes_per_image))
    if batch >= 2:
        max_bt = max(1, min(max_bt, batch // 2))
    bt = 1
    for cand in range(1, batch + 1):
        if batch % cand == 0 and cand <= max_bt:
            bt = cand
    return bt


def _build_and_run(x_flat, wc, bc, w1, b1, w2, b2, *, batch_tile, single_buffer_weights):
    B, C_in, HW = x_flat.shape
    C_feat = wc.shape[1]
    hidden = w1.shape[1]
    num_blocks = B // batch_tile

    kernel = _make_kernel(1.0 / float(HW))

    def const_spec(shape):
        # Constant index_map -> fetched once; single-buffer to free VMEM headroom.
        idx_map = lambda b, _n=len(shape): (0,) * _n
        if single_buffer_weights:
            return pl.BlockSpec(shape, idx_map, pipeline_mode=pl.Buffered(1))
        return pl.BlockSpec(shape, idx_map)

    grid_spec = pltpu.PrefetchScalarGridSpec(
        num_scalar_prefetch=0,
        grid=(num_blocks,),                       # one axis: batch blocks, parallel
        in_specs=[
            pl.BlockSpec((batch_tile, C_in, HW), lambda b: (b, 0, 0)),   # x stream
            const_spec((C_in, C_feat)),                                   # wc
            const_spec((1, C_feat)),                                      # bc
            const_spec((C_feat, hidden)),                                 # w1
            const_spec((1, hidden)),                                      # b1
            const_spec((1, hidden)),                                      # w2 (row vector)
            pl.BlockSpec(memory_space=pltpu.MemorySpace.SMEM),            # b2 scalar
        ],
        out_specs=pl.BlockSpec((1, 1, batch_tile), lambda b: (b, 0, 0)),  # lane-dense ages
    )

    out = pl.pallas_call(
        kernel,
        out_shape=jax.ShapeDtypeStruct((num_blocks, 1, batch_tile), jnp.float32),
        grid_spec=grid_spec,
        compiler_params=pltpu.CompilerParams(
            dimension_semantics=("parallel",),
        ),
    )(x_flat, wc, bc, w1, b1, w2, b2)

    # matches `age_output.squeeze()` in the PyTorch forward
    return out.reshape(B)


def fine_tuned_backbone_forward(x_nchw, params, *, batch_tile=None,
                                vmem_budget_bytes=10 * 1024 * 1024):
    """x_nchw: [B, C_in, H, W] float32/bfloat16 (PyTorch NCHW). Returns [B] ages."""
    B, C_in, H, W = x_nchw.shape
    # Flatten spatial dims in the wrapper: free row-major reshape, lane-dense last dim.
    x_flat = x_nchw.reshape(B, C_in, H * W)

    if batch_tile is None:
        batch_tile = _pick_batch_tile(
            B, C_in * H * W * x_flat.dtype.itemsize, vmem_budget_bytes)
    assert B % batch_tile == 0, "batch must be divisible by the batch tile"

    args = (x_flat, params["wc"], params["bc"], params["w1"], params["b1"],
            params["w2"], params["b2"])
    try:
        return _build_and_run(*args, batch_tile=batch_tile, single_buffer_weights=True)
    except Exception:
        # pipeline_mode=pl.Buffered(1) not honored on this jax/Mosaic build; fall back
        # to default double-buffering of the (small) constant operands.
        return _build_and_run(*args, batch_tile=batch_tile, single_buffer_weights=False)


def init_params(key, c_in, c_feat, hidden=256):
    """Deterministic synthetic parameter init (module __init__ gives the shapes)."""
    k0, k1, k2, k3, k4, k5 = jax.random.split(key, 6)
    s = 0.05
    return {
        # synthetic backbone feature extractor (1x1 pointwise conv): C_in -> C_feat
        "wc": s * jax.random.normal(k0, (c_in, c_feat), jnp.float32),
        "bc": s * jax.random.normal(k1, (1, c_feat), jnp.float32),
        # age_head: Linear(c_feat, hidden) -> ReLU -> Linear(hidden, 1)
        "w1": s * jax.random.normal(k2, (c_feat, hidden), jnp.float32),
        "b1": s * jax.random.normal(k3, (1, hidden), jnp.float32),
        "w2": s * jax.random.normal(k4, (1, hidden), jnp.float32),  # Linear(hidden,1).weight row
        "b2": s * jax.random.normal(k5, (1,), jnp.float32),         # Linear(hidden,1).bias
    }


if __name__ == "__main__":
    key = jax.random.PRNGKey(0)
    k_x, k_p = jax.random.split(key)

    B, C_IN, H, W = 4, 3, 16, 16       # small stand-in for (N, 3, 224, 224)
    C_FEAT = 32                        # small stand-in for efficientnet-b0's 1280 features
    HIDDEN = 256                       # matches nn.Linear(in_features, 256)

    x = jax.random.normal(k_x, (B, C_IN, H, W), jnp.float32)
    params = init_params(k_p, C_IN, C_FEAT, HIDDEN)

    # auto batch_tile -> Bt=2, grid=(2,): exercises multi-image blocks AND a >1-step grid
    y = fine_tuned_backbone_forward(x, params)
    y = jax.block_until_ready(y)
    assert y.shape == (B,), f"unexpected output shape {y.shape}"

    # pure-JAX reference in the ORIGINAL module order: backbone -> avg pool -> flatten -> head
    fmap = jnp.einsum("bchw,cf->bfhw", x, params["wc"]) + params["bc"][0][None, :, None, None]
    feats = jnp.mean(fmap, axis=(2, 3))                                  # [B, C_feat]
    h = jnp.maximum(feats @ params["w1"] + params["b1"], 0.0)            # [B, HIDDEN]
    ref = (h @ params["w2"].T)[:, 0] + params["b2"][0]                   # [B]
    assert jnp.allclose(y, ref, atol=1e-4, rtol=1e-4), "kernel mismatch vs reference"

    print("KERNEL_OK")
</pallas_src>

<mosaic_0001>
module attributes {stable_mosaic.version = 11 : i64} {
  func.func @kernel(%arg0: i32, %arg1: memref<2x3x256xf32, #tpu.memory_space<vmem>>, %arg2: memref<3x32xf32, #tpu.memory_space<vmem>>, %arg3: memref<1x32xf32, #tpu.memory_space<vmem>>, %arg4: memref<32x256xf32, #tpu.memory_space<vmem>>, %arg5: memref<1x256xf32, #tpu.memory_space<vmem>>, %arg6: memref<1x256xf32, #tpu.memory_space<vmem>>, %arg7: memref<1xf32, #tpu.memory_space<smem>>, %arg8: memref<1x1x2xf32, #tpu.memory_space<vmem>>) attributes {dimension_semantics = [#tpu.dimension_semantics<parallel>], iteration_bounds = array<i64: 2>, scalar_prefetch = 0 : i64, scratch_operands = 0 : i64, tpu.core_type = #tpu.core_type<tc>, window_params = [{transform_indices = @transform_0, window_bounds = array<i64: 2, 3, 256>}, {pipeline_mode = #tpu.pipeline_mode<synchronous>, transform_indices = @transform_1, window_bounds = array<i64: 3, 32>}, {pipeline_mode = #tpu.pipeline_mode<synchronous>, transform_indices = @transform_2, window_bounds = array<i64: 1, 32>}, {pipeline_mode = #tpu.pipeline_mode<synchronous>, transform_indices = @transform_3, window_bounds = array<i64: 32, 256>}, {pipeline_mode = #tpu.pipeline_mode<synchronous>, transform_indices = @transform_4, window_bounds = array<i64: 1, 256>}, {pipeline_mode = #tpu.pipeline_mode<synchronous>, transform_indices = @transform_5, window_bounds = array<i64: 1, 256>}, {transform_indices = @transform_6, window_bounds = array<i64: 1>}, {transform_indices = @transform_7, window_bounds = array<i64: 1, 1, 2>}]} {
    %c0 = arith.constant 0 : index
    %c0_0 = arith.constant 0 : index
    %c0_1 = arith.constant 0 : index
    %0 = vector.load %arg1[%c0, %c0_0, %c0_1] : memref<2x3x256xf32, #tpu.memory_space<vmem>>, vector<2x3x256xf32>
    %cst = arith.constant dense<0.000000e+00> : vector<2x3xf32>
    %1 = vector.multi_reduction <add>, %0, %cst [2] : vector<2x3x256xf32> to vector<2x3xf32>
    %cst_2 = arith.constant 3.906250e-03 : f32
    %2 = vector.broadcast %cst_2 : f32 to vector<2x3xf32>
    %3 = arith.mulf %1, %2 : vector<2x3xf32>
    %c0_3 = arith.constant 0 : index
    %c0_4 = arith.constant 0 : index
    %4 = vector.load %arg2[%c0_3, %c0_4] : memref<3x32xf32, #tpu.memory_space<vmem>>, vector<3x32xf32>
    %cst_5 = arith.constant dense<0.000000e+00> : vector<2x32xf32>
    %5 = tpu.matmul %3, %4, %cst_5 {dimension_numbers = #tpu.dot_dimension_numbers<[1], [0], [0], [1], [0, 0, 1, 1], [], []>} : vector<2x3xf32>, vector<3x32xf32>, vector<2x32xf32> -> vector<2x32xf32>
    %c0_6 = arith.constant 0 : index
    %c0_7 = arith.constant 0 : index
    %6 = vector.load %arg3[%c0_6, %c0_7] : memref<1x32xf32, #tpu.memory_space<vmem>>, vector<1x32xf32>
    %7 = vector.broadcast %6 : vector<1x32xf32> to vector<2x32xf32>
    %8 = arith.addf %5, %7 : vector<2x32xf32>
    %c0_8 = arith.constant 0 : index
    %c0_9 = arith.constant 0 : index
    %9 = vector.load %arg4[%c0_8, %c0_9] : memref<32x256xf32, #tpu.memory_space<vmem>>, vector<32x256xf32>
    %cst_10 = arith.constant dense<0.000000e+00> : vector<2x256xf32>
    %10 = tpu.matmul %8, %9, %cst_10 {dimension_numbers = #tpu.dot_dimension_numbers<[1], [0], [0], [1], [0, 0, 1, 1], [], []>} : vector<2x32xf32>, vector<32x256xf32>, vector<2x256xf32> -> vector<2x256xf32>
    %c0_11 = arith.constant 0 : index
    %c0_12 = arith.constant 0 : index
    %11 = vector.load %arg5[%c0_11, %c0_12] : memref<1x256xf32, #tpu.memory_space<vmem>>, vector<1x256xf32>
    %12 = vector.broadcast %11 : vector<1x256xf32> to vector<2x256xf32>
    %13 = arith.addf %10, %12 : vector<2x256xf32>
    %cst_13 = arith.constant 0.000000e+00 : f32
    %14 = vector.broadcast %cst_13 : f32 to vector<2x256xf32>
    %15 = arith.maximumf %13, %14 : vector<2x256xf32>
    %c0_14 = arith.constant 0 : index
    %c0_15 = arith.constant 0 : index
    %16 = vector.load %arg6[%c0_14, %c0_15] : memref<1x256xf32, #tpu.memory_space<vmem>>, vector<1x256xf32>
    %17 = vector.broadcast %16 : vector<1x256xf32> to vector<2x256xf32>
    %18 = arith.mulf %15, %17 : vector<2x256xf32>
    %cst_16 = arith.constant dense<0.000000e+00> : vector<2xf32>
    %19 = vector.multi_reduction <add>, %18, %cst_16 [1] : vector<2x256xf32> to vector<2xf32>
    %c0_17 = arith.constant 0 : index
    %20 = memref.load %arg7[%c0_17] : memref<1xf32, #tpu.memory_space<smem>>
    %21 = vector.broadcast %20 : f32 to vector<2xf32>
    %22 = arith.addf %19, %21 : vector<2xf32>
    %23 = vector.shape_cast %22 : vector<2xf32> to vector<1x1x2xf32>
    %c0_18 = arith.constant 0 : index
    %c0_19 = arith.constant 0 : index
    %c0_20 = arith.constant 0 : index
    %24 = vector.load %arg8[%c0_18, %c0_19, %c0_20] : memref<1x1x2xf32, #tpu.memory_space<vmem>>, vector<1x1x2xf32>
    tpu.vector_store %arg8[%c0_18, %c0_19, %c0_20], %23 {strides = array<i32>} : memref<1x1x2xf32, #tpu.memory_space<vmem>>, vector<1x1x2xf32>,
    return
  }
  func.func @transform_0(%arg0: i32) -> (i32, i32, i32) {
    %c0_i32 = arith.constant 0 : i32
    %c0_i32_0 = arith.constant 0 : i32
    %c0_i32_1 = arith.constant 0 : i32
    return %arg0, %c0_i32, %c0_i32_0 : i32, i32, i32
  }
  func.func @transform_1(%arg0: i32) -> (i32, i32) {
    %c0_i32 = arith.constant 0 : i32
    %c0_i32_0 = arith.constant 0 : i32
    %c0_i32_1 = arith.constant 0 : i32
    return %c0_i32, %c0_i32_0 : i32, i32
  }
  func.func @transform_2(%arg0: i32) -> (i32, i32) {
    %c0_i32 = arith.constant 0 : i32
    %c0_i32_0 = arith.constant 0 : i32
    %c0_i32_1 = arith.constant 0 : i32
    return %c0_i32, %c0_i32_0 : i32, i32
  }
  func.func @transform_3(%arg0: i32) -> (i32, i32) {
    %c0_i32 = arith.constant 0 : i32
    %c0_i32_0 = arith.constant 0 : i32
    %c0_i32_1 = arith.constant 0 : i32
    return %c0_i32, %c0_i32_0 : i32, i32
  }
  func.func @transform_4(%arg0: i32) -> (i32, i32) {
    %c0_i32 = arith.constant 0 : i32
    %c0_i32_0 = arith.constant 0 : i32
    %c0_i32_1 = arith.constant 0 : i32
    return %c0_i32, %c0_i32_0 : i32, i32
  }
  func.func @transform_5(%arg0: i32) -> (i32, i32) {
    %c0_i32 = arith.constant 0 : i32
    %c0_i32_0 = arith.constant 0 : i32
    %c0_i32_1 = arith.constant 0 : i32
    return %c0_i32, %c0_i32_0 : i32, i32
  }
  func.func @transform_6(%arg0: i32) -> i32 {
    %c0_i32 = arith.constant 0 : i32
    %c0_i32_0 = arith.constant 0 : i32
    return %c0_i32 : i32
  }
  func.func @transform_7(%arg0: i32) -> (i32, i32, i32) {
    %c0_i32 = arith.constant 0 : i32
    %c0_i32_0 = arith.constant 0 : i32
    %c0_i32_1 = arith.constant 0 : i32
    return %arg0, %c0_i32, %c0_i32_0 : i32, i32, i32
  }
}

module attributes {stable_mosaic.version = 11 : i64} {
  func.func @kernel(%arg0: i32, %arg1: memref<2x3x256xf32, #tpu.memory_space<vmem>>, %arg2: memref<3x32xf32, #tpu.memory_space<vmem>>, %arg3: memref<1x32xf32, #tpu.memory_space<vmem>>, %arg4: memref<32x256xf32, #tpu.memory_space<vmem>>, %arg5: memref<1x256xf32, #tpu.memory_space<vmem>>, %arg6: memref<1x256xf32, #tpu.memory_space<vmem>>, %arg7: memref<1xf32, #tpu.memory_space<smem>>, %arg8: memref<1x1x2xf32, #tpu.memory_space<vmem>>) attributes {dimension_semantics = [#tpu.dimension_semantics<parallel>], iteration_bounds = array<i64: 2>, scalar_prefetch = 0 : i64, scratch_operands = 0 : i64, tpu.core_type = #tpu.core_type<tc>, window_params = [{transform_indices = @transform_0, window_bounds = array<i64: 2, 3, 256>}, {pipeline_mode = #tpu.pipeline_mode<synchronous>, transform_indices = @transform_1, window_bounds = array<i64: 3, 32>}, {pipeline_mode = #tpu.pipeline_mode<synchronous>, transform_indices = @transform_2, window_bounds = array<i64: 1, 32>}, {pipeline_mode = #tpu.pipeline_mode<synchronous>, transform_indices = @transform_3, window_bounds = array<i64: 32, 256>}, {pipeline_mode = #tpu.pipeline_mode<synchronous>, transform_indices = @transform_4, window_bounds = array<i64: 1, 256>}, {pipeline_mode = #tpu.pipeline_mode<synchronous>, transform_indices = @transform_5, window_bounds = array<i64: 1, 256>}, {transform_indices = @transform_6, window_bounds = array<i64: 1>}, {transform_indices = @transform_7, window_bounds = array<i64: 1, 1, 2>}]} {
    %c0 = arith.constant 0 : index
    %c0_0 = arith.constant 0 : index
    %c0_1 = arith.constant 0 : index
    %0 = vector.load %arg1[%c0, %c0_0, %c0_1] : memref<2x3x256xf32, #tpu.memory_space<vmem>>, vector<2x3x256xf32>
    %cst = arith.constant dense<0.000000e+00> : vector<2x3xf32>
    %1 = vector.multi_reduction <add>, %0, %cst [2] : vector<2x3x256xf32> to vector<2x3xf32>
    %cst_2 = arith.constant 3.906250e-03 : f32
    %2 = vector.broadcast %cst_2 : f32 to vector<2x3xf32>
    %3 = arith.mulf %1, %2 : vector<2x3xf32>
    %c0_3 = arith.constant 0 : index
    %c0_4 = arith.constant 0 : index
    %4 = vector.load %arg2[%c0_3, %c0_4] : memref<3x32xf32, #tpu.memory_space<vmem>>, vector<3x32xf32>
    %cst_5 = arith.constant dense<0.000000e+00> : vector<2x32xf32>
    %5 = tpu.matmul %3, %4, %cst_5 {dimension_numbers = #tpu.dot_dimension_numbers<[1], [0], [0], [1], [0, 0, 1, 1], [], []>} : vector<2x3xf32>, vector<3x32xf32>, vector<2x32xf32> -> vector<2x32xf32>
    %c0_6 = arith.constant 0 : index
    %c0_7 = arith.constant 0 : index
    %6 = vector.load %arg3[%c0_6, %c0_7] : memref<1x32xf32, #tpu.memory_space<vmem>>, vector<1x32xf32>
    %7 = vector.broadcast %6 : vector<1x32xf32> to vector<2x32xf32>
    %8 = arith.addf %5, %7 : vector<2x32xf32>
    %c0_8 = arith.constant 0 : index
    %c0_9 = arith.constant 0 : index
    %9 = vector.load %arg4[%c0_8, %c0_9] : memref<32x256xf32, #tpu.memory_space<vmem>>, vector<32x256xf32>
    %cst_10 = arith.constant dense<0.000000e+00> : vector<2x256xf32>
    %10 = tpu.matmul %8, %9, %cst_10 {dimension_numbers = #tpu.dot_dimension_numbers<[1], [0], [0], [1], [0, 0, 1, 1], [], []>} : vector<2x32xf32>, vector<32x256xf32>, vector<2x256xf32> -> vector<2x256xf32>
    %c0_11 = arith.constant 0 : index
    %c0_12 = arith.constant 0 : index
    %11 = vector.load %arg5[%c0_11, %c0_12] : memref<1x256xf32, #tpu.memory_space<vmem>>, vector<1x256xf32>
    %12 = vector.broadcast %11 : vector<1x256xf32> to vector<2x256xf32>
    %13 = arith.addf %10, %12 : vector<2x256xf32>
    %cst_13 = arith.constant 0.000000e+00 : f32
    %14 = vector.broadcast %cst_13 : f32 to vector<2x256xf32>
    %15 = arith.maximumf %13, %14 : vector<2x256xf32>
    %c0_14 = arith.constant 0 : index
    %c0_15 = arith.constant 0 : index
    %16 = vector.load %arg6[%c0_14, %c0_15] : memref<1x256xf32, #tpu.memory_space<vmem>>, vector<1x256xf32>
    %17 = vector.broadcast %16 : vector<1x256xf32> to vector<2x256xf32>
    %18 = arith.mulf %15, %17 : vector<2x256xf32>
    %cst_16 = arith.constant dense<0.000000e+00> : vector<2xf32>
    %19 = vector.multi_reduction <add>, %18, %cst_16 [1] : vector<2x256xf32> to vector<2xf32>
    %c0_17 = arith.constant 0 : index
    %20 = memref.load %arg7[%c0_17] : memref<1xf32, #tpu.memory_space<smem>>
    %21 = vector.broadcast %20 : f32 to vector<2xf32>
    %22 = arith.addf %19, %21 : vector<2xf32>
    %23 = vector.shape_cast %22 : vector<2xf32> to vector<1x1x2xf32>
    %c0_18 = arith.constant 0 : index
    %c0_19 = arith.constant 0 : index
    %c0_20 = arith.constant 0 : index
    %24 = vector.load %arg8[%c0_18, %c0_19, %c0_20] : memref<1x1x2xf32, #tpu.memory_space<vmem>>, vector<1x1x2xf32>
    tpu.vector_store %arg8[%c0_18, %c0_19, %c0_20], %23 {strides = array<i32>} : memref<1x1x2xf32, #tpu.memory_space<vmem>>, vector<1x1x2xf32>,
    return
  }
  func.func @transform_0(%arg0: i32) -> (i32, i32, i32) {
    %c0_i32 = arith.constant 0 : i32
    %c0_i32_0 = arith.constant 0 : i32
    %c0_i32_1 = arith.constant 0 : i32
    return %arg0, %c0_i32, %c0_i32_0 : i32, i32, i32
  }
  func.func @transform_1(%arg0: i32) -> (i32, i32) {
    %c0_i32 = arith.constant 0 : i32
    %c0_i32_0 = arith.constant 0 : i32
    %c0_i32_1 = arith.constant 0 : i32
    return %c0_i32, %c0_i32_0 : i32, i32
  }
  func.func @transform_2(%arg0: i32) -> (i32, i32) {
    %c0_i32 = arith.constant 0 : i32
    %c0_i32_0 = arith.constant 0 : i32
    %c0_i32_1 = arith.constant 0 : i32
    return %c0_i32, %c0_i32_0 : i32, i32
  }
  func.func @transform_3(%arg0: i32) -> (i32, i32) {
    %c0_i32 = arith.constant 0 : i32
    %c0_i32_0 = arith.constant 0 : i32
    %c0_i32_1 = arith.constant 0 : i32
    return %c0_i32, %c0_i32_0 : i32, i32
  }
  func.func @transform_4(%arg0: i32) -> (i32, i32) {
    %c0_i32 = arith.constant 0 : i32
    %c0_i32_0 = arith.constant 0 : i32
    %c0_i32_1 = arith.constant 0 : i32
    return %c0_i32, %c0_i32_0 : i32, i32
  }
  func.func @transform_5(%arg0: i32) -> (i32, i32) {
    %c0_i32 = arith.constant 0 : i32
    %c0_i32_0 = arith.constant 0 : i32
    %c0_i32_1 = arith.constant 0 : i32
    return %c0_i32, %c0_i32_0 : i32, i32
  }
  func.func @transform_6(%arg0: i32) -> i32 {
    %c0_i32 = arith.constant 0 : i32
    %c0_i32_0 = arith.constant 0 : i32
    return %c0_i32 : i32
  }
  func.func @transform_7(%arg0: i32) -> (i32, i32, i32) {
    %c0_i32 = arith.constant 0 : i32
    %c0_i32_0 = arith.constant 0 : i32
    %c0_i32_1 = arith.constant 0 : i32
    return %arg0, %c0_i32, %c0_i32_0 : i32, i32, i32
  }
}

</mosaic_0001>

<llo_original>
// kernel: tpu_custom_call.1
$region0: #{tpu_custom_call.1}
  #allocation0 [shape = 'u32[]', space=smem, size = 0x4, offset = 0x4, fixed_abs, tag = 'smem constant byte address 0x4 - core index']
  #allocation1 [shape = 'u32[144,128]{1,0:T(1,128)}', space=vmem, size = 0x12000, scoped, tag = 'internal scratch']
  #allocation2 [shape = 'f32[1]{0:T(128)S(6)}', space=smem, size = 0x200, scoped, tag = 'scoped memory for tpu_custom_call.1']
  %s0 = inlined_call_operand.vmem [shape: f32[4,3,256], index: 0, kind: input, shape index: {}]
  %s1 = inlined_call_operand.vmem [shape: f32[3,32], index: 1, kind: input, shape index: {}]
  %s2 = inlined_call_operand.vmem [shape: f32[1,32], index: 2, kind: input, shape index: {}]
  %s3 = inlined_call_operand.hbm [shape: f32[32,256], index: 3, kind: input, shape index: {}]
  %s4 = inlined_call_operand.vmem [shape: f32[1,256], index: 4, kind: input, shape index: {}]
  %s5 = inlined_call_operand.vmem [shape: f32[1,256], index: 5, kind: input, shape index: {}]
  %s6 = inlined_call_operand.<no memory space> [shape: f32[1], index: 6, kind: input, shape index: {}]
  %s7 = inlined_call_operand.hbm [shape: f32[2,1,2], index: 7, kind: output, shape index: {}]
  %s8 = sld [smem:[#allocation0]]
  $region65: #{tpu_custom_call.1} parent=0
    _
  %s10 = ssub.s32 1, %s8
  %s11 = scalar_select 0, %s10, %s8
  %12 = sst [smem:[#allocation2]] %s6
  $region1: #{tpu_custom_call.1} parent=0
    #allocation3 [shape = 'u8[32768]{0}', space=vmem, size = 0x8000, scoped, tag = 'input window, operand 3, single buffered']
    #allocation4 [shape = 's32[2]{0}', space=sflag, size = 0x8, scoped, tag = 'scoped memory for tpu_custom_call.1']
    #allocation5 [shape = 's32[2]{0}', space=sflag, size = 0x8, scoped, tag = 'scoped memory for tpu_custom_call.1']
    #allocation6 [shape = 'u8[1024]{0}', space=vmem, size = 0x400, scoped, tag = 'output window, operand 0']
    %13 = vsyncpa [#allocation4], 0
    %14 = vsyncpa [#allocation5], 0
    %s15 = scalar_lea.sflag [#allocation5], 1
    %16 = vsyncpa %s15, 0
    loop: start=0, step=1, limit=4
    $region2: #{tpu_custom_call.1} parent=1 // loop_pre_header
      _
    $region3: #{tpu_custom_call.1} parent=1 // loop_header
      %s18 = sphi 0, %s22
      %p19 = scmp.ge.s32.totalorder %s18, 4
      %s28 = sphi 0, %s30
      %s31 = sphi 0, %s28
      %s32 = sphi 0, %s31
      %s48 = sphi 0, %s32
      %s52 = sphi 0, %s52
      %s54 = sphi 0, %s52
      %s55 = sphi 0, %s54
      %s69 = sphi 0, %s55
      %s73 = sphi 0, %s73
      %s75 = sphi 0, %s73
      %s76 = sphi 0, %s75
      %s90 = sphi 0, %s76
      %s94 = sphi 0, %s94
      %s96 = sphi 0, %s94
      %s97 = sphi 0, %s96
      %s111 = sphi 0, %s97
      %s115 = sphi 0, %s115
      %s117 = sphi 0, %s115
      %s118 = sphi 0, %s117
      %s132 = sphi 0, %s118
      %s136 = sphi 0, %s136
      %s138 = sphi 0, %s136
      %s139 = sphi 0, %s138
      %s153 = sphi 0, %s139
      %s157 = sphi 0, %s157
      %s159 = sphi 0, %s157
      %s160 = sphi 0, %s159
      %s174 = sphi 0, %s160
      %s180 = sphi 0, %s182
      %s183 = sphi 0, %s180
      %s184 = sphi 0, %s183
      %s200 = sphi 0, %s184
    $region4: #{tpu_custom_call.1} parent=1 // loop_header_branch
      %21 = sbr.rel (%p19) target = $region8
    $region5: #{tpu_custom_call.1} parent=1 // loop_body
      %s23 = ssub.s32 %s18, 1
      %s24 = ssub.s32 %s18, 2
      %s25 = sadd.s32 %s18, 1
      %s26 = ssub.s32 %s18, %s25
      %p27 = scmp.eq.s32.totalorder %s26, 0
      %s29 = sadd.s32 %s28, 1
      %s30 = scalar_select %p27, %s28, %s29
      %p33 = pneg %p27
      %p34 = scmp.eq.s32.totalorder %s18, 1
      %p35 = por %p33, %p34
      %p36 = scmp.ne.s32.totalorder %s28, %s31
      %p37 = scmp.eq.s32.totalorder %s18, 0
      %p38 = por %p36, %p37
      %p39 = scmp.ne.s32.totalorder %s28, %s31
      %p40 = scmp.eq.s32.totalorder %s23, 1
      %p41 = por %p39, %p40
      %p42 = scmp.ne.s32.totalorder %s31, %s32
      %p43 = scmp.eq.s32.totalorder %s23, 0
      %p44 = por %p42, %p43
      %p45 = scmp.ne.s32.totalorder %s31, %s32
      %p46 = scmp.eq.s32.totalorder %s24, 1
      %p47 = por %p45, %p46
      %p49 = scmp.ne.s32.totalorder %s32, %s48
      %p50 = scmp.eq.s32.totalorder %s24, 0
      %p51 = por %p49, %p50
      %s53 = sadd.s32 %s52, 1
      %p56 = scmp.eq.s32.totalorder %s18, 1
      %p57 = scmp.ne.s32.totalorder %s52, %s54
      %p58 = scmp.eq.s32.totalorder %s18, 0
      %p59 = por %p57, %p58
      %p60 = scmp.ne.s32.totalorder %s52, %s54
      %p61 = scmp.eq.s32.totalorder %s23, 1
      %p62 = por %p60, %p61
      %p63 = scmp.ne.s32.totalorder %s54, %s55
      %p64 = scmp.eq.s32.totalorder %s23, 0
      %p65 = por %p63, %p64
      %p66 = scmp.ne.s32.totalorder %s54, %s55
      %p67 = scmp.eq.s32.totalorder %s24, 1
      %p68 = por %p66, %p67
      %p70 = scmp.ne.s32.totalorder %s55, %s69
      %p71 = scmp.eq.s32.totalorder %s24, 0
      %p72 = por %p70, %p71
      %s74 = sadd.s32 %s73, 1
      %p77 = scmp.eq.s32.totalorder %s18, 1
      %p78 = scmp.ne.s32.totalorder %s73, %s75
      %p79 = scmp.eq.s32.totalorder %s18, 0
      %p80 = por %p78, %p79
      %p81 = scmp.ne.s32.totalorder %s73, %s75
      %p82 = scmp.eq.s32.totalorder %s23, 1
      %p83 = por %p81, %p82
      %p84 = scmp.ne.s32.totalorder %s75, %s76
      %p85 = scmp.eq.s32.totalorder %s23, 0
      %p86 = por %p84, %p85
      %p87 = scmp.ne.s32.totalorder %s75, %s76
      %p88 = scmp.eq.s32.totalorder %s24, 1
      %p89 = por %p87, %p88
      %p91 = scmp.ne.s32.totalorder %s76, %s90
      %p92 = scmp.eq.s32.totalorder %s24, 0
      %p93 = por %p91, %p92
      %s95 = sadd.s32 %s94, 1
      %p98 = scmp.eq.s32.totalorder %s18, 1
      %p99 = scmp.ne.s32.totalorder %s94, %s96
      %p100 = scmp.eq.s32.totalorder %s18, 0
      %p101 = por %p99, %p100
      %p102 = scmp.ne.s32.totalorder %s94, %s96
      %p103 = scmp.eq.s32.totalorder %s23, 1
      %p104 = por %p102, %p103
      %p105 = scmp.ne.s32.totalorder %s96, %s97
      %p106 = scmp.eq.s32.totalorder %s23, 0
      %p107 = por %p105, %p106
      %p108 = scmp.ne.s32.totalorder %s96, %s97
      %p109 = scmp.eq.s32.totalorder %s24, 1
      %p110 = por %p108, %p109
      %p112 = scmp.ne.s32.totalorder %s97, %s111
      %p113 = scmp.eq.s32.totalorder %s24, 0
      %p114 = por %p112, %p113
      %s116 = sadd.s32 %s115, 1
      %p119 = scmp.eq.s32.totalorder %s18, 1
      %p120 = scmp.ne.s32.totalorder %s115, %s117
      %p121 = scmp.eq.s32.totalorder %s18, 0
      %p122 = por %p120, %p121
      %p123 = scmp.ne.s32.totalorder %s115, %s117
      %p124 = scmp.eq.s32.totalorder %s23, 1
      %p125 = por %p123, %p124
      %p126 = scmp.ne.s32.totalorder %s117, %s118
      %p127 = scmp.eq.s32.totalorder %s23, 0
      %p128 = por %p126, %p127
      %p129 = scmp.ne.s32.totalorder %s117, %s118
      %p130 = scmp.eq.s32.totalorder %s24, 1
      %p131 = por %p129, %p130
      %p133 = scmp.ne.s32.totalorder %s118, %s132
      %p134 = scmp.eq.s32.totalorder %s24, 0
      %p135 = por %p133, %p134
      %s137 = sadd.s32 %s136, 1
      %p140 = scmp.eq.s32.totalorder %s18, 1
      %p141 = scmp.ne.s32.totalorder %s136, %s138
      %p142 = scmp.eq.s32.totalorder %s18, 0
      %p143 = por %p141, %p142
      %p144 = scmp.ne.s32.totalorder %s136, %s138
      %p145 = scmp.eq.s32.totalorder %s23, 1
      %p146 = por %p144, %p145
      %p147 = scmp.ne.s32.totalorder %s138, %s139
      %p148 = scmp.eq.s32.totalorder %s23, 0
      %p149 = por %p147, %p148
      %p150 = scmp.ne.s32.totalorder %s138, %s139
      %p151 = scmp.eq.s32.totalorder %s24, 1
      %p152 = por %p150, %p151
      %p154 = scmp.ne.s32.totalorder %s139, %s153
      %p155 = scmp.eq.s32.totalorder %s24, 0
      %p156 = por %p154, %p155
      %s158 = sadd.s32 %s157, 1
      %p161 = scmp.eq.s32.totalorder %s18, 1
      %p162 = scmp.ne.s32.totalorder %s157, %s159
      %p163 = scmp.eq.s32.totalorder %s18, 0
      %p164 = por %p162, %p163
      %p165 = scmp.ne.s32.totalorder %s157, %s159
      %p166 = scmp.eq.s32.totalorder %s23, 1
      %p167 = por %p165, %p166
      %p168 = scmp.ne.s32.totalorder %s159, %s160
      %p169 = scmp.eq.s32.totalorder %s23, 0
      %p170 = por %p168, %p169
      %p171 = scmp.ne.s32.totalorder %s159, %s160
      %p172 = scmp.eq.s32.totalorder %s24, 1
      %p173 = por %p171, %p172
      %p175 = scmp.ne.s32.totalorder %s160, %s174
      %p176 = scmp.eq.s32.totalorder %s24, 0
      %p177 = por %p175, %p176
      %s178 = ssub.s32 %s18, %s25
      %p179 = scmp.eq.s32.totalorder %s178, 0
      %s181 = sadd.s32 %s180, 1
      %s182 = scalar_select %p179, %s180, %s181
      %p185 = pneg %p179
      %p186 = scmp.eq.s32.totalorder %s18, 1
      %p187 = por %p185, %p186
      %p188 = scmp.ne.s32.totalorder %s180, %s183
      %p189 = scmp.eq.s32.totalorder %s18, 0
      %p190 = por %p188, %p189
      %p191 = scmp.ne.s32.totalorder %s180, %s183
      %p192 = scmp.eq.s32.totalorder %s23, 1
      %p193 = por %p191, %p192
      %p194 = scmp.ne.s32.totalorder %s183, %s184
      %p195 = scmp.eq.s32.totalorder %s23, 0
      %p196 = por %p194, %p195
      %p197 = scmp.ne.s32.totalorder %s183, %s184
      %p198 = scmp.eq.s32.totalorder %s24, 1
      %p199 = por %p197, %p198
      %p201 = scmp.ne.s32.totalorder %s184, %s200
      %p202 = scmp.eq.s32.totalorder %s24, 0
      %p203 = por %p201, %p202
      %p204 = scmp.le.s32.totalorder 1, %s18
      %p205 = scmp.lt.s32.totalorder %s18, 3
      %p206 = pnand %p204, %p205
      %p207 = pneg %p206
      // Predicated region
      $region9: #{tpu_custom_call.1} parent=5 // pred_check
        _
      $region10: #{tpu_custom_call.1} parent=5 // pred_check_branch
        %209 = sbr.rel (%p206) target = $region12
      $region11: #{tpu_custom_call.1} parent=5 // pred_region
        %s210 = ssub.s32 %s18, 1
        // Predicated region
        $region13: #{tpu_custom_call.1} parent=11 // pred_check
          %p211 = pneg %p65
        $region14: #{tpu_custom_call.1} parent=11 // pred_check_branch
          %213 = sbr.rel (%p211) target = $region16
        $region15: #{tpu_custom_call.1} parent=11 // pred_region
          _
        $region16: #{tpu_custom_call.1} parent=11 // pred_fallthru
          _
        // Predicated region
        $region17: #{tpu_custom_call.1} parent=11 // pred_check
          %p214 = pneg %p86
        $region18: #{tpu_custom_call.1} parent=11 // pred_check_branch
          %216 = sbr.rel (%p214) target = $region20
        $region19: #{tpu_custom_call.1} parent=11 // pred_region
          _
        $region20: #{tpu_custom_call.1} parent=11 // pred_fallthru
          _
        // Predicated region
        $region21: #{tpu_custom_call.1} parent=11 // pred_check
          %p217 = pneg %p107
        $region22: #{tpu_custom_call.1} parent=11 // pred_check_branch
          %219 = sbr.rel (%p217) target = $region24
        $region23: #{tpu_custom_call.1} parent=11 // pred_region
          %s221 = ssub.s32 1024, 1024
          %222 = vsyncadd [#allocation4], %s221
          %s223 = sshll.u32 [#allocation3], 4
          %s224 = int_to_ptr.vmem [resolvable:$true] %s223
          %229 = dma.hbm_to_vmem [thread:$0]  %s3, 1024, %s224, [#allocation4], 256, 256, 16
        $region24: #{tpu_custom_call.1} parent=11 // pred_fallthru
          _
        // Predicated region
        $region25: #{tpu_custom_call.1} parent=11 // pred_check
          %p230 = pneg %p128
        $region26: #{tpu_custom_call.1} parent=11 // pred_check_branch
          %232 = sbr.rel (%p230) target = $region28
        $region27: #{tpu_custom_call.1} parent=11 // pred_region
          _
        $region28: #{tpu_custom_call.1} parent=11 // pred_fallthru
          _
        // Predicated region
        $region29: #{tpu_custom_call.1} parent=11 // pred_check
          %p233 = pneg %p149
        $region30: #{tpu_custom_call.1} parent=11 // pred_check_branch
          %235 = sbr.rel (%p233) target = $region32
        $region31: #{tpu_custom_call.1} parent=11 // pred_region
          _
        $region32: #{tpu_custom_call.1} parent=11 // pred_fallthru
          _
        // Predicated region
        $region33: #{tpu_custom_call.1} parent=11 // pred_check
          %p236 = pneg %p170
        $region34: #{tpu_custom_call.1} parent=11 // pred_check_branch
          %238 = sbr.rel (%p236) target = $region36
        $region35: #{tpu_custom_call.1} parent=11 // pred_region
          _
        $region36: #{tpu_custom_call.1} parent=11 // pred_fallthru
          _
      $region12: #{tpu_custom_call.1} parent=5 // pred_fallthru
        _
      %p239 = scmp.lt.s32.totalorder %s18, 2
      // Predicated region
      $region37: #{tpu_custom_call.1} parent=5 // pred_check
        %p240 = pneg %p239
      $region38: #{tpu_custom_call.1} parent=5 // pred_check_branch
        %242 = sbr.rel (%p240) target = $region40
      $region39: #{tpu_custom_call.1} parent=5 // pred_region
        // Predicated region
        $region41: #{tpu_custom_call.1} parent=39 // pred_check
          %p243 = pneg %p38
        $region42: #{tpu_custom_call.1} parent=39 // pred_check_branch
          %245 = sbr.rel (%p243) target = $region44
        $region43: #{tpu_custom_call.1} parent=39 // pred_region
          %s246 = smul.u32 2, %s18
          %p247 = scmp.lt.s32.totalorder %s246, 3
          %s248 = scalar_select %p247, %s246, 3
          %s249 = smul.addr %s248, 2
          %s250 = smul.addr %s249, 4
          %s251 = scalar_lea.vmem %s0, %s250
          %s252 = smul.u32 2, %s18
        $region44: #{tpu_custom_call.1} parent=39 // pred_fallthru
          _
      $region40: #{tpu_custom_call.1} parent=5 // pred_fallthru
        _
      %p253 = scmp.le.s32.totalorder 1, %s18
      %p254 = scmp.lt.s32.totalorder %s18, 3
      %p255 = pnand %p253, %p254
      %p256 = pneg %p255
      // Predicated region
      $region45: #{tpu_custom_call.1} parent=5 // pred_check
        _
      $region46: #{tpu_custom_call.1} parent=5 // pred_check_branch
        %258 = sbr.rel (%p255) target = $region48
      $region47: #{tpu_custom_call.1} parent=5 // pred_region
        %s259 = ssub.s32 %s18, 1
        // Predicated region
        $region49: #{tpu_custom_call.1} parent=47 // pred_check
          %p260 = pneg %p107
        $region50: #{tpu_custom_call.1} parent=47 // pred_check_branch
          %262 = sbr.rel (%p260) target = $region52
        $region51: #{tpu_custom_call.1} parent=47 // pred_region
          %263 = dma.done [#allocation4], 1024
        $region52: #{tpu_custom_call.1} parent=47 // pred_fallthru
          _
        %s264 = smul.u32 2, %s23
        %p265 = scmp.lt.s32.totalorder %s264, 3
        %s266 = scalar_select %p265, %s264, 3
        %s267 = smul.addr %s266, 2
        %s268 = smul.addr %s267, 4
        %s269 = scalar_lea.vmem %s0, %s268
        %p270 = pneg %p44
        %p271 = pneg %p41
        %p272 = pneg %p65
        %p273 = pneg %p62
        %p274 = pneg %p86
        %p275 = pneg %p83
        %p276 = pneg %p107
        %p277 = pneg %p104
        %p278 = pneg %p128
        %p279 = pneg %p125
        %p280 = pneg %p149
        %p281 = pneg %p146
        %p282 = pneg %p170
        %p283 = pneg %p167
        %p284 = pneg %p196
        %p285 = pneg %p193
        %s286 = sand.u32 %s183, 1
        %s287 = scalar_lea.sflag [#allocation5], %s286
        %s288 = sand.u32 %s183, 1
        %s289 = scalar_lea.vmem [#allocation6], %s288
        %s290 = smul.u32 2, %s23
        %p291 = scmp.lt.s32.totalorder %s290, 3
        %s292 = scalar_select %p291, %s290, 3
        %s293 = smul.addr %s292, 2
        %s294 = smul.addr %s293, 4
        %s295 = scalar_lea.vmem %s0, %s294
        %s296 = smul.u32 2, %s23
        %v297 = vld [vmem:[%s295] sm:$0x77]
        %v298 = vld [vmem:[%s295 + $0x8] sm:$0x77]
        %v301 = vcombine.high %v297, %v297
        %v302 = vcombine.high %v298, %v298
        %vm305 = vcmask 1042432
        %v306 = vsel %vm305, %v297, 0.0
        %v307 = vsel %vm305, %v301, 0.0
        %v308 = vadd.f32 %v306, %v307
        %309 = vadd.xlane.f32.xlu0 %v308
        %v310 = vpop.xlane.xlu0 %309
        %v311 = vsel %vm305, %v298, 0.0
        %v312 = vsel %vm305, %v302, 0.0
        %v313 = vadd.f32 %v311, %v312
        %314 = vadd.xlane.f32.xlu0 %v313
        %v315 = vpop.xlane.xlu0 %314
        %v316 = vmul.f32 %v310, 0.00390625
        %v317 = vmul.f32 %v315, 0.00390625
        %v318 = vld [vmem:[%s1] sm:$0x7]
        %v319 = vld [vmem:[%s2] sm:$0x1]
        %v321 = vlaneseq
        %v322 = vshrl.u32 %v321, 7
        %v323 = vsub.s32 0, %v322
        %v324 = vrot.slane %v319, %v323
        %v328 = vlaneseq
        %v329 = vand.u32 %v328, 127
        %v330 = vlaneseq
        %v331 = vshrl.u32 %v330, 7
        %v332 = vsub.s32 %v329, %v331
        %v333 = vrot.slane %v316, %v332
        %v334 = vlaneseq
        %v335 = vshrl.u32 %v334, 7
        %v336 = vsub.s32 %v329, %v335
        %v337 = vrot.slane %v317, %v336
        %vm338 = vcmask 1041409
        %v339 = vsel %vm338, %v337, %v333
        %vm340 = vcmask 23552
        %v341 = vsel %vm340, %v339, 0
        %v344 = vsel %vm305, %v318, 0
        %346 = vmatprep.subr.mxu0 0.0
        %347 = vmatpush1.msra.mxu0 0.0
        %348 = vmatprep.subr.mxu0 0.0
        %349 = vmatpush1.msra.mxu0 0.0
        %350 = vmatprep.subr.mxu0 0.0
        %351 = vmatpush1.msra.mxu0 0.0
        %352 = vmatprep.subr.mxu0 0.0
        %353 = vmatpush1.msra.mxu0 0.0
        %354 = vmatprep.subr.mxu0 0.0
        %355 = vmatpush1.msra.mxu0 0.0
        %356 = vmatprep.subr.mxu0 0.0
        %357 = vmatpush1.msra.mxu0 0.0
        %358 = vmatprep.subr.mxu0 0.0
        %359 = vmatpush1.msra.mxu0 0.0
        %360 = vmatprep.subr.mxu0 0.0
        %361 = vmatpush1.msra.mxu0 0.0
        %362 = vmatprep.subr.mxu0 0.0
        %363 = vmatpush1.msra.mxu0 0.0
        %364 = vmatprep.subr.mxu0 0.0
        %365 = vmatpush1.msra.mxu0 0.0
        %366 = vmatprep.subr.mxu0 0.0
        %367 = vmatpush1.msra.mxu0 0.0
        %368 = vmatprep.subr.mxu0 0.0
        %369 = vmatpush1.msra.mxu0 0.0
        %370 = vmatprep.subr.mxu0 0.0
        %371 = vmatpush1.msra.mxu0 0.0
        %372 = vmatprep.subr.mxu0 0.0
        %373 = vmatpush1.msra.mxu0 0.0
        %374 = vmatprep.subr.mxu0 0.0
        %375 = vmatpush1.msra.mxu0 0.0
        %376 = vmatprep.subr.mxu0 0.0
        %377 = vmatpush1.msra.mxu0 %v344
        %378 = vmatprep.subr.mxu0 0.0
        %379 = vmatpush2.msra.mxu0 0.0
        %380 = vmatprep.subr.mxu0 0.0
        %381 = vmatpush2.msra.mxu0 0.0
        %382 = vmatprep.subr.mxu0 0.0
        %383 = vmatpush2.msra.mxu0 0.0
        %384 = vmatprep.subr.mxu0 0.0
        %385 = vmatpush2.msra.mxu0 0.0
        %386 = vmatprep.subr.mxu0 0.0
        %387 = vmatpush2.msra.mxu0 0.0
        %388 = vmatprep.subr.mxu0 0.0
        %389 = vmatpush2.msra.mxu0 0.0
        %390 = vmatprep.subr.mxu0 0.0
        %391 = vmatpush2.msra.mxu0 0.0
        %392 = vmatprep.subr.mxu0 0.0
        %393 = vmatpush2.msra.mxu0 0.0
        %394 = vmatprep.subr.mxu0 0.0
        %395 = vmatpush2.msra.mxu0 0.0
        %396 = vmatprep.subr.mxu0 0.0
        %397 = vmatpush2.msra.mxu0 0.0
        %398 = vmatprep.subr.mxu0 0.0
        %399 = vmatpush2.msra.mxu0 0.0
        %400 = vmatprep.subr.mxu0 0.0
        %401 = vmatpush2.msra.mxu0 0.0
        %402 = vmatprep.subr.mxu0 0.0
        %403 = vmatpush2.msra.mxu0 0.0
        %404 = vmatprep.subr.mxu0 0.0
        %405 = vmatpush2.msra.mxu0 0.0
        %406 = vmatprep.subr.mxu0 0.0
        %407 = vmatpush2.msra.mxu0 0.0
        %408 = vmatprep.subr.mxu0 0.0
        %409 = vmatpush2.msra.mxu0 0.0
        %410 = vmatprep.mubr.f32.mxu0 0.0
        %411 = vmatmul.mubr.f32.gmra.mxu0 %v341
        %v412 = vpop.f32.mrf.mxu0
        %v413 = vadd.f32 %v324, %v412
        %v414 = vpop.f32.mrf.mxu0
        %415 = vdwg.mxu0
        %v416 = vld [vmem:[#allocation3] sm:$0xff]
        %v417 = vld [vmem:[#allocation3 + $0x8] sm:$0xff]
        %v418 = vld [vmem:[#allocation3 + $0x10] sm:$0xff]
        %v419 = vld [vmem:[#allocation3 + $0x18] sm:$0xff]
        %v420 = vld [vmem:[#allocation3 + $0x20] sm:$0xff]
        %v421 = vld [vmem:[#allocation3 + $0x28] sm:$0xff]
        %v422 = vld [vmem:[#allocation3 + $0x30] sm:$0xff]
        %v423 = vld [vmem:[#allocation3 + $0x38] sm:$0xff]
        %v424 = vld [vmem:[%s4] sm:$0x3]
        %v426 = vlaneseq
        %v427 = vshrl.u32 %v426, 7
        %v428 = vsub.s32 0, %v427
        %v429 = vrot.slane %v424, %v428
        %v430 = vlaneseq
        %v431 = vshrl.u32 %v430, 7
        %v432 = vsub.s32 1, %v431
        %v433 = vrot.slane %v424, %v432
        %vm436 = vcmask 261120
        %v438 = vsel %vm436, %v413, 0
        %440 = vmatprep.subr.mxu0 0.0
        %441 = vmatpush1.msra.mxu0 0.0
        %442 = vmatprep.subr.mxu0 0.0
        %443 = vmatpush1.msra.mxu0 0.0
        %444 = vmatprep.subr.mxu0 0.0
        %445 = vmatpush1.msra.mxu0 0.0
        %446 = vmatprep.subr.mxu0 0.0
        %447 = vmatpush1.msra.mxu0 0.0
        %448 = vmatprep.subr.mxu0 0.0
        %449 = vmatpush1.msra.mxu0 0.0
        %450 = vmatprep.subr.mxu0 0.0
        %451 = vmatpush1.msra.mxu0 0.0
        %452 = vmatprep.subr.mxu0 0.0
        %453 = vmatpush1.msra.mxu0 0.0
        %454 = vmatprep.subr.mxu0 0.0
        %455 = vmatpush1.msra.mxu0 0.0
        %456 = vmatprep.subr.mxu0 0.0
        %457 = vmatpush1.msra.mxu0 0.0
        %458 = vmatprep.subr.mxu0 0.0
        %459 = vmatpush1.msra.mxu0 0.0
        %460 = vmatprep.subr.mxu0 0.0
        %461 = vmatpush1.msra.mxu0 0.0
        %462 = vmatprep.subr.mxu0 0.0
        %463 = vmatpush1.msra.mxu0 0.0
        %464 = vmatprep.subr.mxu0 %v423
        %465 = vmatpush1.msra.mxu0 %v422
        %466 = vmatprep.subr.mxu0 %v421
        %467 = vmatpush1.msra.mxu0 %v420
        %468 = vmatprep.subr.mxu0 %v419
        %469 = vmatpush1.msra.mxu0 %v418
        %470 = vmatprep.subr.mxu0 %v417
        %471 = vmatpush1.msra.mxu0 %v416
        %472 = vmatprep.subr.mxu0 0.0
        %473 = vmatpush2.msra.mxu0 0.0
        %474 = vmatprep.subr.mxu0 0.0
        %475 = vmatpush2.msra.mxu0 0.0
        %476 = vmatprep.subr.mxu0 0.0
        %477 = vmatpush2.msra.mxu0 0.0
        %478 = vmatprep.subr.mxu0 0.0
        %479 = vmatpush2.msra.mxu0 0.0
        %480 = vmatprep.subr.mxu0 0.0
        %481 = vmatpush2.msra.mxu0 0.0
        %482 = vmatprep.subr.mxu0 0.0
        %483 = vmatpush2.msra.mxu0 0.0
        %484 = vmatprep.subr.mxu0 0.0
        %485 = vmatpush2.msra.mxu0 0.0
        %486 = vmatprep.subr.mxu0 0.0
        %487 = vmatpush2.msra.mxu0 0.0
        %488 = vmatprep.subr.mxu0 0.0
        %489 = vmatpush2.msra.mxu0 0.0
        %490 = vmatprep.subr.mxu0 0.0
        %491 = vmatpush2.msra.mxu0 0.0
        %492 = vmatprep.subr.mxu0 0.0
        %493 = vmatpush2.msra.mxu0 0.0
        %494 = vmatprep.subr.mxu0 0.0
        %495 = vmatpush2.msra.mxu0 0.0
        %496 = vmatprep.subr.mxu0 0.0
        %497 = vmatpush2.msra.mxu0 0.0
        %498 = vmatprep.subr.mxu0 0.0
        %499 = vmatpush2.msra.mxu0 0.0
        %500 = vmatprep.subr.mxu0 0.0
        %501 = vmatpush2.msra.mxu0 0.0
        %502 = vmatprep.subr.mxu0 0.0
        %503 = vmatpush2.msra.mxu0 0.0
        %504 = vmatprep.mubr.f32.mxu0 0.0
        %505 = vmatmul.mubr.f32.gmra.mxu0 %v438
        %v506 = vpop.f32.mrf.mxu0
        %v507 = vadd.f32 %v429, %v506
        %v508 = vpop.f32.mrf.mxu0
        %v509 = vadd.f32 %v433, %v508
        %510 = vdwg.mxu0
        %v511 = vmax.f32 %v507, 0.0
        %v512 = vmax.f32 %v509, 0.0
        %v513 = vld [vmem:[%s5] sm:$0x3]
        %v515 = vlaneseq
        %v516 = vshrl.u32 %v515, 7
        %v517 = vsub.s32 0, %v516
        %v518 = vrot.slane %v513, %v517
        %v519 = vlaneseq
        %v520 = vshrl.u32 %v519, 7
        %v521 = vsub.s32 1, %v520
        %v522 = vrot.slane %v513, %v521
        %v525 = vmul.f32 %v511, %v518
        %v526 = vmul.f32 %v512, %v522
        %vm527 = vcmask 1041408
        %v528 = vsel %vm527, %v525, 0.0
        %v529 = vsel %vm527, %v526, 0.0
        %v530 = vadd.f32 %v528, %v529
        %531 = vadd.xlane.f32.xlu0 %v530
        %v532 = vpop.xlane.xlu0 %531
        %s533 = sld [smem:[#allocation2]]
        %v534 = vstv %s533
        %v535 = vadd.f32 %v532, %v534
        %v537 = vlaneseq
        %v538 = vshrl.u32 %v537, 7
        %v539 = vsub.s32 %v329, %v538
        %v540 = vrot.slane %v535, %v539
        %vm542 = vcmask 8192
        %543 = vst.msk [vmem:[%s289] sm:$0x1] %vm542, %v540
        %s544 = sand.u32 %s183, 1
        %s545 = scalar_lea.sflag [#allocation5], %s544
        %s546 = sand.u32 %s183, 1
        %s547 = scalar_lea.vmem [#allocation6], %s546
        // Predicated region
        $region53: #{tpu_custom_call.1} parent=47 // pred_check
          %p548 = pneg %p193
        $region54: #{tpu_custom_call.1} parent=47 // pred_check_branch
          %550 = sbr.rel (%p548) target = $region56
        $region55: #{tpu_custom_call.1} parent=47 // pred_region
          %s552 = ssub.s32 16, 16
          %553 = vsyncadd %s545, %s552
          %s554 = smul.addr %s23, 16
          %s555 = scalar_lea.hbm %s7, %s554
          %s557 = sshll.u32 %s547, 4
          %s558 = int_to_ptr.vmem [resolvable:$true] %s557
          %560 = dma.vmem_to_hbm [thread:$0]  %s558, 16, %s555, %s545
        $region56: #{tpu_custom_call.1} parent=47 // pred_fallthru
          _
      $region48: #{tpu_custom_call.1} parent=5 // pred_fallthru
        _
      %p561 = scmp.le.s32.totalorder 2, %s18
      // Predicated region
      $region57: #{tpu_custom_call.1} parent=5 // pred_check
        %p562 = pneg %p561
      $region58: #{tpu_custom_call.1} parent=5 // pred_check_branch
        %564 = sbr.rel (%p562) target = $region60
      $region59: #{tpu_custom_call.1} parent=5 // pred_region
        %s565 = ssub.s32 %s18, 2
        // Predicated region
        $region61: #{tpu_custom_call.1} parent=59 // pred_check
          %p566 = pneg %p199
        $region62: #{tpu_custom_call.1} parent=59 // pred_check_branch
          %568 = sbr.rel (%p566) target = $region64
        $region63: #{tpu_custom_call.1} parent=59 // pred_region
          %s569 = sand.u32 %s184, 1
          %s570 = scalar_lea.sflag [#allocation5], %s569
          %s571 = sand.u32 %s184, 1
          %s572 = scalar_lea.vmem [#allocation6], %s571
          %573 = dma.done %s570, 16
        $region64: #{tpu_custom_call.1} parent=59 // pred_fallthru
          _
      $region60: #{tpu_custom_call.1} parent=5 // pred_fallthru
        _
    $region6: #{tpu_custom_call.1} parent=1 // loop_footer
      %s22 = sadd.s32 1, %s18
    $region7: #{tpu_custom_call.1} parent=1 // loop_footer_branch
      %17 = sbr.rel target = $region3
    $region8: #{tpu_custom_call.1} parent=1 // loop_exit
      _
    %574 = vsyncpa [#allocation4], 1
    %s575 = scalar_lea.sflag [#allocation4], 1
    %576 = vsyncpa %s575, 1
    %577 = vsyncpa [#allocation5], 1
    %s578 = scalar_lea.sflag [#allocation5], 1
    %579 = vsyncpa %s578, 1

// kernel: tpu_custom_call.1
$region0: #{tpu_custom_call.1}
  #allocation0 [shape = 'u32[]', space=smem, size = 0x4, offset = 0x4, fixed_abs, tag = 'smem constant byte address 0x4 - core index']
  #allocation1 [shape = 'u32[144,128]{1,0:T(1,128)}', space=vmem, size = 0x12000, scoped, tag = 'internal scratch']
  #allocation2 [shape = 'f32[1]{0:T(128)S(6)}', space=smem, size = 0x200, scoped, tag = 'scoped memory for tpu_custom_call.1']
  %s0 = inlined_call_operand.vmem [shape: f32[4,3,256], index: 0, kind: input, shape index: {}]
  %s1 = inlined_call_operand.vmem [shape: f32[3,32], index: 1, kind: input, shape index: {}]
  %s2 = inlined_call_operand.vmem [shape: f32[1,32], index: 2, kind: input, shape index: {}]
  %s3 = inlined_call_operand.hbm [shape: f32[32,256], index: 3, kind: input, shape index: {}]
  %s4 = inlined_call_operand.vmem [shape: f32[1,256], index: 4, kind: input, shape index: {}]
  %s5 = inlined_call_operand.vmem [shape: f32[1,256], index: 5, kind: input, shape index: {}]
  %s6 = inlined_call_operand.<no memory space> [shape: f32[1], index: 6, kind: input, shape index: {}]
  %s7 = inlined_call_operand.hbm [shape: f32[2,1,2], index: 7, kind: output, shape index: {}]
  %s8 = sld [smem:[#allocation0]]
  $region65: #{tpu_custom_call.1} parent=0
    _
  %s10 = ssub.s32 1, %s8
  %s11 = scalar_select 0, %s10, %s8
  %12 = sst [smem:[#allocation2]] %s6
  $region1: #{tpu_custom_call.1} parent=0
    #allocation3 [shape = 'u8[32768]{0}', space=vmem, size = 0x8000, scoped, tag = 'input window, operand 3, single buffered']
    #allocation4 [shape = 's32[2]{0}', space=sflag, size = 0x8, scoped, tag = 'scoped memory for tpu_custom_call.1']
    #allocation5 [shape = 's32[2]{0}', space=sflag, size = 0x8, scoped, tag = 'scoped memory for tpu_custom_call.1']
    #allocation6 [shape = 'u8[1024]{0}', space=vmem, size = 0x400, scoped, tag = 'output window, operand 0']
    %13 = vsyncpa [#allocation4], 0
    %14 = vsyncpa [#allocation5], 0
    %s15 = scalar_lea.sflag [#allocation5], 1
    %16 = vsyncpa %s15, 0
    loop: start=0, step=1, limit=4
    $region2: #{tpu_custom_call.1} parent=1 // loop_pre_header
      _
    $region3: #{tpu_custom_call.1} parent=1 // loop_header
      %s18 = sphi 0, %s22
      %p19 = scmp.ge.s32.totalorder %s18, 4
      %s28 = sphi 0, %s30
      %s31 = sphi 0, %s28
      %s32 = sphi 0, %s31
      %s48 = sphi 0, %s32
      %s52 = sphi 0, %s52
      %s54 = sphi 0, %s52
      %s55 = sphi 0, %s54
      %s69 = sphi 0, %s55
      %s73 = sphi 0, %s73
      %s75 = sphi 0, %s73
      %s76 = sphi 0, %s75
      %s90 = sphi 0, %s76
      %s94 = sphi 0, %s94
      %s96 = sphi 0, %s94
      %s97 = sphi 0, %s96
      %s111 = sphi 0, %s97
      %s115 = sphi 0, %s115
      %s117 = sphi 0, %s115
      %s118 = sphi 0, %s117
      %s132 = sphi 0, %s118
      %s136 = sphi 0, %s136
      %s138 = sphi 0, %s136
      %s139 = sphi 0, %s138
      %s153 = sphi 0, %s139
      %s157 = sphi 0, %s157
      %s159 = sphi 0, %s157
      %s160 = sphi 0, %s159
      %s174 = sphi 0, %s160
      %s180 = sphi 0, %s182
      %s183 = sphi 0, %s180
      %s184 = sphi 0, %s183
      %s200 = sphi 0, %s184
    $region4: #{tpu_custom_call.1} parent=1 // loop_header_branch
      %21 = sbr.rel (%p19) target = $region8
    $region5: #{tpu_custom_call.1} parent=1 // loop_body
      %s23 = ssub.s32 %s18, 1
      %s24 = ssub.s32 %s18, 2
      %s25 = sadd.s32 %s18, 1
      %s26 = ssub.s32 %s18, %s25
      %p27 = scmp.eq.s32.totalorder %s26, 0
      %s29 = sadd.s32 %s28, 1
      %s30 = scalar_select %p27, %s28, %s29
      %p33 = pneg %p27
      %p34 = scmp.eq.s32.totalorder %s18, 1
      %p35 = por %p33, %p34
      %p36 = scmp.ne.s32.totalorder %s28, %s31
      %p37 = scmp.eq.s32.totalorder %s18, 0
      %p38 = por %p36, %p37
      %p39 = scmp.ne.s32.totalorder %s28, %s31
      %p40 = scmp.eq.s32.totalorder %s23, 1
      %p41 = por %p39, %p40
      %p42 = scmp.ne.s32.totalorder %s31, %s32
      %p43 = scmp.eq.s32.totalorder %s23, 0
      %p44 = por %p42, %p43
      %p45 = scmp.ne.s32.totalorder %s31, %s32
      %p46 = scmp.eq.s32.totalorder %s24, 1
      %p47 = por %p45, %p46
      %p49 = scmp.ne.s32.totalorder %s32, %s48
      %p50 = scmp.eq.s32.totalorder %s24, 0
      %p51 = por %p49, %p50
      %s53 = sadd.s32 %s52, 1
      %p56 = scmp.eq.s32.totalorder %s18, 1
      %p57 = scmp.ne.s32.totalorder %s52, %s54
      %p58 = scmp.eq.s32.totalorder %s18, 0
      %p59 = por %p57, %p58
      %p60 = scmp.ne.s32.totalorder %s52, %s54
      %p61 = scmp.eq.s32.totalorder %s23, 1
      %p62 = por %p60, %p61
      %p63 = scmp.ne.s32.totalorder %s54, %s55
      %p64 = scmp.eq.s32.totalorder %s23, 0
      %p65 = por %p63, %p64
      %p66 = scmp.ne.s32.totalorder %s54, %s55
      %p67 = scmp.eq.s32.totalorder %s24, 1
      %p68 = por %p66, %p67
      %p70 = scmp.ne.s32.totalorder %s55, %s69
      %p71 = scmp.eq.s32.totalorder %s24, 0
      %p72 = por %p70, %p71
      %s74 = sadd.s32 %s73, 1
      %p77 = scmp.eq.s32.totalorder %s18, 1
      %p78 = scmp.ne.s32.totalorder %s73, %s75
      %p79 = scmp.eq.s32.totalorder %s18, 0
      %p80 = por %p78, %p79
      %p81 = scmp.ne.s32.totalorder %s73, %s75
      %p82 = scmp.eq.s32.totalorder %s23, 1
      %p83 = por %p81, %p82
      %p84 = scmp.ne.s32.totalorder %s75, %s76
      %p85 = scmp.eq.s32.totalorder %s23, 0
      %p86 = por %p84, %p85
      %p87 = scmp.ne.s32.totalorder %s75, %s76
      %p88 = scmp.eq.s32.totalorder %s24, 1
      %p89 = por %p87, %p88
      %p91 = scmp.ne.s32.totalorder %s76, %s90
      %p92 = scmp.eq.s32.totalorder %s24, 0
      %p93 = por %p91, %p92
      %s95 = sadd.s32 %s94, 1
      %p98 = scmp.eq.s32.totalorder %s18, 1
      %p99 = scmp.ne.s32.totalorder %s94, %s96
      %p100 = scmp.eq.s32.totalorder %s18, 0
      %p101 = por %p99, %p100
      %p102 = scmp.ne.s32.totalorder %s94, %s96
      %p103 = scmp.eq.s32.totalorder %s23, 1
      %p104 = por %p102, %p103
      %p105 = scmp.ne.s32.totalorder %s96, %s97
      %p106 = scmp.eq.s32.totalorder %s23, 0
      %p107 = por %p105, %p106
      %p108 = scmp.ne.s32.totalorder %s96, %s97
      %p109 = scmp.eq.s32.totalorder %s24, 1
      %p110 = por %p108, %p109
      %p112 = scmp.ne.s32.totalorder %s97, %s111
      %p113 = scmp.eq.s32.totalorder %s24, 0
      %p114 = por %p112, %p113
      %s116 = sadd.s32 %s115, 1
      %p119 = scmp.eq.s32.totalorder %s18, 1
      %p120 = scmp.ne.s32.totalorder %s115, %s117
      %p121 = scmp.eq.s32.totalorder %s18, 0
      %p122 = por %p120, %p121
      %p123 = scmp.ne.s32.totalorder %s115, %s117
      %p124 = scmp.eq.s32.totalorder %s23, 1
      %p125 = por %p123, %p124
      %p126 = scmp.ne.s32.totalorder %s117, %s118
      %p127 = scmp.eq.s32.totalorder %s23, 0
      %p128 = por %p126, %p127
      %p129 = scmp.ne.s32.totalorder %s117, %s118
      %p130 = scmp.eq.s32.totalorder %s24, 1
      %p131 = por %p129, %p130
      %p133 = scmp.ne.s32.totalorder %s118, %s132
      %p134 = scmp.eq.s32.totalorder %s24, 0
      %p135 = por %p133, %p134
      %s137 = sadd.s32 %s136, 1
      %p140 = scmp.eq.s32.totalorder %s18, 1
      %p141 = scmp.ne.s32.totalorder %s136, %s138
      %p142 = scmp.eq.s32.totalorder %s18, 0
      %p143 = por %p141, %p142
      %p144 = scmp.ne.s32.totalorder %s136, %s138
      %p145 = scmp.eq.s32.totalorder %s23, 1
      %p146 = por %p144, %p145
      %p147 = scmp.ne.s32.totalorder %s138, %s139
      %p148 = scmp.eq.s32.totalorder %s23, 0
      %p149 = por %p147, %p148
      %p150 = scmp.ne.s32.totalorder %s138, %s139
      %p151 = scmp.eq.s32.totalorder %s24, 1
      %p152 = por %p150, %p151
      %p154 = scmp.ne.s32.totalorder %s139, %s153
      %p155 = scmp.eq.s32.totalorder %s24, 0
      %p156 = por %p154, %p155
      %s158 = sadd.s32 %s157, 1
      %p161 = scmp.eq.s32.totalorder %s18, 1
      %p162 = scmp.ne.s32.totalorder %s157, %s159
      %p163 = scmp.eq.s32.totalorder %s18, 0
      %p164 = por %p162, %p163
      %p165 = scmp.ne.s32.totalorder %s157, %s159
      %p166 = scmp.eq.s32.totalorder %s23, 1
      %p167 = por %p165, %p166
      %p168 = scmp.ne.s32.totalorder %s159, %s160
      %p169 = scmp.eq.s32.totalorder %s23, 0
      %p170 = por %p168, %p169
      %p171 = scmp.ne.s32.totalorder %s159, %s160
      %p172 = scmp.eq.s32.totalorder %s24, 1
      %p173 = por %p171, %p172
      %p175 = scmp.ne.s32.totalorder %s160, %s174
      %p176 = scmp.eq.s32.totalorder %s24, 0
      %p177 = por %p175, %p176
      %s178 = ssub.s32 %s18, %s25
      %p179 = scmp.eq.s32.totalorder %s178, 0
      %s181 = sadd.s32 %s180, 1
      %s182 = scalar_select %p179, %s180, %s181
      %p185 = pneg %p179
      %p186 = scmp.eq.s32.totalorder %s18, 1
      %p187 = por %p185, %p186
      %p188 = scmp.ne.s32.totalorder %s180, %s183
      %p189 = scmp.eq.s32.totalorder %s18, 0
      %p190 = por %p188, %p189
      %p191 = scmp.ne.s32.totalorder %s180, %s183
      %p192 = scmp.eq.s32.totalorder %s23, 1
      %p193 = por %p191, %p192
      %p194 = scmp.ne.s32.totalorder %s183, %s184
      %p195 = scmp.eq.s32.totalorder %s23, 0
      %p196 = por %p194, %p195
      %p197 = scmp.ne.s32.totalorder %s183, %s184
      %p198 = scmp.eq.s32.totalorder %s24, 1
      %p199 = por %p197, %p198
      %p201 = scmp.ne.s32.totalorder %s184, %s200
      %p202 = scmp.eq.s32.totalorder %s24, 0
      %p203 = por %p201, %p202
      %p204 = scmp.le.s32.totalorder 1, %s18
      %p205 = scmp.lt.s32.totalorder %s18, 3
      %p206 = pnand %p204, %p205
      %p207 = pneg %p206
      // Predicated region
      $region9: #{tpu_custom_call.1} parent=5 // pred_check
        _
      $region10: #{tpu_custom_call.1} parent=5 // pred_check_branch
        %209 = sbr.rel (%p206) target = $region12
      $region11: #{tpu_custom_call.1} parent=5 // pred_region
        %s210 = ssub.s32 %s18, 1
        // Predicated region
        $region13: #{tpu_custom_call.1} parent=11 // pred_check
          %p211 = pneg %p65
        $region14: #{tpu_custom_call.1} parent=11 // pred_check_branch
          %213 = sbr.rel (%p211) target = $region16
        $region15: #{tpu_custom_call.1} parent=11 // pred_region
          _
        $region16: #{tpu_custom_call.1} parent=11 // pred_fallthru
          _
        // Predicated region
        $region17: #{tpu_custom_call.1} parent=11 // pred_check
          %p214 = pneg %p86
        $region18: #{tpu_custom_call.1} parent=11 // pred_check_branch
          %216 = sbr.rel (%p214) target = $region20
        $region19: #{tpu_custom_call.1} parent=11 // pred_region
          _
        $region20: #{tpu_custom_call.1} parent=11 // pred_fallthru
          _
        // Predicated region
        $region21: #{tpu_custom_call.1} parent=11 // pred_check
          %p217 = pneg %p107
        $region22: #{tpu_custom_call.1} parent=11 // pred_check_branch
          %219 = sbr.rel (%p217) target = $region24
        $region23: #{tpu_custom_call.1} parent=11 // pred_region
          %s221 = ssub.s32 1024, 1024
          %222 = vsyncadd [#allocation4], %s221
          %s223 = sshll.u32 [#allocation3], 4
          %s224 = int_to_ptr.vmem [resolvable:$true] %s223
          %229 = dma.hbm_to_vmem [thread:$0]  %s3, 1024, %s224, [#allocation4], 256, 256, 16
        $region24: #{tpu_custom_call.1} parent=11 // pred_fallthru
          _
        // Predicated region
        $region25: #{tpu_custom_call.1} parent=11 // pred_check
          %p230 = pneg %p128
        $region26: #{tpu_custom_call.1} parent=11 // pred_check_branch
          %232 = sbr.rel (%p230) target = $region28
        $region27: #{tpu_custom_call.1} parent=11 // pred_region
          _
        $region28: #{tpu_custom_call.1} parent=11 // pred_fallthru
          _
        // Predicated region
        $region29: #{tpu_custom_call.1} parent=11 // pred_check
          %p233 = pneg %p149
        $region30: #{tpu_custom_call.1} parent=11 // pred_check_branch
          %235 = sbr.rel (%p233) target = $region32
        $region31: #{tpu_custom_call.1} parent=11 // pred_region
          _
        $region32: #{tpu_custom_call.1} parent=11 // pred_fallthru
          _
        // Predicated region
        $region33: #{tpu_custom_call.1} parent=11 // pred_check
          %p236 = pneg %p170
        $region34: #{tpu_custom_call.1} parent=11 // pred_check_branch
          %238 = sbr.rel (%p236) target = $region36
        $region35: #{tpu_custom_call.1} parent=11 // pred_region
          _
        $region36: #{tpu_custom_call.1} parent=11 // pred_fallthru
          _
      $region12: #{tpu_custom_call.1} parent=5 // pred_fallthru
        _
      %p239 = scmp.lt.s32.totalorder %s18, 2
      // Predicated region
      $region37: #{tpu_custom_call.1} parent=5 // pred_check
        %p240 = pneg %p239
      $region38: #{tpu_custom_call.1} parent=5 // pred_check_branch
        %242 = sbr.rel (%p240) target = $region40
      $region39: #{tpu_custom_call.1} parent=5 // pred_region
        // Predicated region
        $region41: #{tpu_custom_call.1} parent=39 // pred_check
          %p243 = pneg %p38
        $region42: #{tpu_custom_call.1} parent=39 // pred_check_branch
          %245 = sbr.rel (%p243) target = $region44
        $region43: #{tpu_custom_call.1} parent=39 // pred_region
          %s246 = smul.u32 2, %s18
          %p247 = scmp.lt.s32.totalorder %s246, 3
          %s248 = scalar_select %p247, %s246, 3
          %s249 = smul.addr %s248, 2
          %s250 = smul.addr %s249, 4
          %s251 = scalar_lea.vmem %s0, %s250
          %s252 = smul.u32 2, %s18
        $region44: #{tpu_custom_call.1} parent=39 // pred_fallthru
          _
      $region40: #{tpu_custom_call.1} parent=5 // pred_fallthru
        _
      %p253 = scmp.le.s32.totalorder 1, %s18
      %p254 = scmp.lt.s32.totalorder %s18, 3
      %p255 = pnand %p253, %p254
      %p256 = pneg %p255
      // Predicated region
      $region45: #{tpu_custom_call.1} parent=5 // pred_check
        _
      $region46: #{tpu_custom_call.1} parent=5 // pred_check_branch
        %258 = sbr.rel (%p255) target = $region48
      $region47: #{tpu_custom_call.1} parent=5 // pred_region
        %s259 = ssub.s32 %s18, 1
        // Predicated region
        $region49: #{tpu_custom_call.1} parent=47 // pred_check
          %p260 = pneg %p107
        $region50: #{tpu_custom_call.1} parent=47 // pred_check_branch
          %262 = sbr.rel (%p260) target = $region52
        $region51: #{tpu_custom_call.1} parent=47 // pred_region
          %263 = dma.done [#allocation4], 1024
        $region52: #{tpu_custom_call.1} parent=47 // pred_fallthru
          _
        %s264 = smul.u32 2, %s23
        %p265 = scmp.lt.s32.totalorder %s264, 3
        %s266 = scalar_select %p265, %s264, 3
        %s267 = smul.addr %s266, 2
        %s268 = smul.addr %s267, 4
        %s269 = scalar_lea.vmem %s0, %s268
        %p270 = pneg %p44
        %p271 = pneg %p41
        %p272 = pneg %p65
        %p273 = pneg %p62
        %p274 = pneg %p86
        %p275 = pneg %p83
        %p276 = pneg %p107
        %p277 = pneg %p104
        %p278 = pneg %p128
        %p279 = pneg %p125
        %p280 = pneg %p149
        %p281 = pneg %p146
        %p282 = pneg %p170
        %p283 = pneg %p167
        %p284 = pneg %p196
        %p285 = pneg %p193
        %s286 = sand.u32 %s183, 1
        %s287 = scalar_lea.sflag [#allocation5], %s286
        %s288 = sand.u32 %s183, 1
        %s289 = scalar_lea.vmem [#allocation6], %s288
        %s290 = smul.u32 2, %s23
        %p291 = scmp.lt.s32.totalorder %s290, 3
        %s292 = scalar_select %p291, %s290, 3
        %s293 = smul.addr %s292, 2
        %s294 = smul.addr %s293, 4
        %s295 = scalar_lea.vmem %s0, %s294
        %s296 = smul.u32 2, %s23
        %v297 = vld [vmem:[%s295] sm:$0x77]
        %v298 = vld [vmem:[%s295 + $0x8] sm:$0x77]
        %v301 = vcombine.high %v297, %v297
        %v302 = vcombine.high %v298, %v298
        %vm305 = vcmask 1042432
        %v306 = vsel %vm305, %v297, 0.0
        %v307 = vsel %vm305, %v301, 0.0
        %v308 = vadd.f32 %v306, %v307
        %309 = vadd.xlane.f32.xlu0 %v308
        %v310 = vpop.xlane.xlu0 %309
        %v311 = vsel %vm305, %v298, 0.0
        %v312 = vsel %vm305, %v302, 0.0
        %v313 = vadd.f32 %v311, %v312
        %314 = vadd.xlane.f32.xlu0 %v313
        %v315 = vpop.xlane.xlu0 %314
        %v316 = vmul.f32 %v310, 0.00390625
        %v317 = vmul.f32 %v315, 0.00390625
        %v318 = vld [vmem:[%s1] sm:$0x7]
        %v319 = vld [vmem:[%s2] sm:$0x1]
        %v321 = vlaneseq
        %v322 = vshrl.u32 %v321, 7
        %v323 = vsub.s32 0, %v322
        %v324 = vrot.slane %v319, %v323
        %v328 = vlaneseq
        %v329 = vand.u32 %v328, 127
        %v330 = vlaneseq
        %v331 = vshrl.u32 %v330, 7
        %v332 = vsub.s32 %v329, %v331
        %v333 = vrot.slane %v316, %v332
        %v334 = vlaneseq
        %v335 = vshrl.u32 %v334, 7
        %v336 = vsub.s32 %v329, %v335
        %v337 = vrot.slane %v317, %v336
        %vm338 = vcmask 1041409
        %v339 = vsel %vm338, %v337, %v333
        %vm340 = vcmask 23552
        %v341 = vsel %vm340, %v339, 0
        %v344 = vsel %vm305, %v318, 0
        %346 = vmatprep.subr.mxu0 0.0
        %347 = vmatpush1.msra.mxu0 0.0
        %348 = vmatprep.subr.mxu0 0.0
        %349 = vmatpush1.msra.mxu0 0.0
        %350 = vmatprep.subr.mxu0 0.0
        %351 = vmatpush1.msra.mxu0 0.0
        %352 = vmatprep.subr.mxu0 0.0
        %353 = vmatpush1.msra.mxu0 0.0
        %354 = vmatprep.subr.mxu0 0.0
        %355 = vmatpush1.msra.mxu0 0.0
        %356 = vmatprep.subr.mxu0 0.0
        %357 = vmatpush1.msra.mxu0 0.0
        %358 = vmatprep.subr.mxu0 0.0
        %359 = vmatpush1.msra.mxu0 0.0
        %360 = vmatprep.subr.mxu0 0.0
        %361 = vmatpush1.msra.mxu0 0.0
        %362 = vmatprep.subr.mxu0 0.0
        %363 = vmatpush1.msra.mxu0 0.0
        %364 = vmatprep.subr.mxu0 0.0
        %365 = vmatpush1.msra.mxu0 0.0
        %366 = vmatprep.subr.mxu0 0.0
        %367 = vmatpush1.msra.mxu0 0.0
        %368 = vmatprep.subr.mxu0 0.0
        %369 = vmatpush1.msra.mxu0 0.0
        %370 = vmatprep.subr.mxu0 0.0
        %371 = vmatpush1.msra.mxu0 0.0
        %372 = vmatprep.subr.mxu0 0.0
        %373 = vmatpush1.msra.mxu0 0.0
        %374 = vmatprep.subr.mxu0 0.0
        %375 = vmatpush1.msra.mxu0 0.0
        %376 = vmatprep.subr.mxu0 0.0
        %377 = vmatpush1.msra.mxu0 %v344
        %378 = vmatprep.subr.mxu0 0.0
        %379 = vmatpush2.msra.mxu0 0.0
        %380 = vmatprep.subr.mxu0 0.0
        %381 = vmatpush2.msra.mxu0 0.0
        %382 = vmatprep.subr.mxu0 0.0
        %383 = vmatpush2.msra.mxu0 0.0
        %384 = vmatprep.subr.mxu0 0.0
        %385 = vmatpush2.msra.mxu0 0.0
        %386 = vmatprep.subr.mxu0 0.0
        %387 = vmatpush2.msra.mxu0 0.0
        %388 = vmatprep.subr.mxu0 0.0
        %389 = vmatpush2.msra.mxu0 0.0
        %390 = vmatprep.subr.mxu0 0.0
        %391 = vmatpush2.msra.mxu0 0.0
        %392 = vmatprep.subr.mxu0 0.0
        %393 = vmatpush2.msra.mxu0 0.0
        %394 = vmatprep.subr.mxu0 0.0
        %395 = vmatpush2.msra.mxu0 0.0
        %396 = vmatprep.subr.mxu0 0.0
        %397 = vmatpush2.msra.mxu0 0.0
        %398 = vmatprep.subr.mxu0 0.0
        %399 = vmatpush2.msra.mxu0 0.0
        %400 = vmatprep.subr.mxu0 0.0
        %401 = vmatpush2.msra.mxu0 0.0
        %402 = vmatprep.subr.mxu0 0.0
        %403 = vmatpush2.msra.mxu0 0.0
        %404 = vmatprep.subr.mxu0 0.0
        %405 = vmatpush2.msra.mxu0 0.0
        %406 = vmatprep.subr.mxu0 0.0
        %407 = vmatpush2.msra.mxu0 0.0
        %408 = vmatprep.subr.mxu0 0.0
        %409 = vmatpush2.msra.mxu0 0.0
        %410 = vmatprep.mubr.f32.mxu0 0.0
        %411 = vmatmul.mubr.f32.gmra.mxu0 %v341
        %v412 = vpop.f32.mrf.mxu0
        %v413 = vadd.f32 %v324, %v412
        %v414 = vpop.f32.mrf.mxu0
        %415 = vdwg.mxu0
        %v416 = vld [vmem:[#allocation3] sm:$0xff]
        %v417 = vld [vmem:[#allocation3 + $0x8] sm:$0xff]
        %v418 = vld [vmem:[#allocation3 + $0x10] sm:$0xff]
        %v419 = vld [vmem:[#allocation3 + $0x18] sm:$0xff]
        %v420 = vld [vmem:[#allocation3 + $0x20] sm:$0xff]
        %v421 = vld [vmem:[#allocation3 + $0x28] sm:$0xff]
        %v422 = vld [vmem:[#allocation3 + $0x30] sm:$0xff]
        %v423 = vld [vmem:[#allocation3 + $0x38] sm:$0xff]
        %v424 = vld [vmem:[%s4] sm:$0x3]
        %v426 = vlaneseq
        %v427 = vshrl.u32 %v426, 7
        %v428 = vsub.s32 0, %v427
        %v429 = vrot.slane %v424, %v428
        %v430 = vlaneseq
        %v431 = vshrl.u32 %v430, 7
        %v432 = vsub.s32 1, %v431
        %v433 = vrot.slane %v424, %v432
        %vm436 = vcmask 261120
        %v438 = vsel %vm436, %v413, 0
        %440 = vmatprep.subr.mxu0 0.0
        %441 = vmatpush1.msra.mxu0 0.0
        %442 = vmatprep.subr.mxu0 0.0
        %443 = vmatpush1.msra.mxu0 0.0
        %444 = vmatprep.subr.mxu0 0.0
        %445 = vmatpush1.msra.mxu0 0.0
        %446 = vmatprep.subr.mxu0 0.0
        %447 = vmatpush1.msra.mxu0 0.0
        %448 = vmatprep.subr.mxu0 0.0
        %449 = vmatpush1.msra.mxu0 0.0
        %450 = vmatprep.subr.mxu0 0.0
        %451 = vmatpush1.msra.mxu0 0.0
        %452 = vmatprep.subr.mxu0 0.0
        %453 = vmatpush1.msra.mxu0 0.0
        %454 = vmatprep.subr.mxu0 0.0
        %455 = vmatpush1.msra.mxu0 0.0
        %456 = vmatprep.subr.mxu0 0.0
        %457 = vmatpush1.msra.mxu0 0.0
        %458 = vmatprep.subr.mxu0 0.0
        %459 = vmatpush1.msra.mxu0 0.0
        %460 = vmatprep.subr.mxu0 0.0
        %461 = vmatpush1.msra.mxu0 0.0
        %462 = vmatprep.subr.mxu0 0.0
        %463 = vmatpush1.msra.mxu0 0.0
        %464 = vmatprep.subr.mxu0 %v423
        %465 = vmatpush1.msra.mxu0 %v422
        %466 = vmatprep.subr.mxu0 %v421
        %467 = vmatpush1.msra.mxu0 %v420
        %468 = vmatprep.subr.mxu0 %v419
        %469 = vmatpush1.msra.mxu0 %v418
        %470 = vmatprep.subr.mxu0 %v417
        %471 = vmatpush1.msra.mxu0 %v416
        %472 = vmatprep.subr.mxu0 0.0
        %473 = vmatpush2.msra.mxu0 0.0
        %474 = vmatprep.subr.mxu0 0.0
        %475 = vmatpush2.msra.mxu0 0.0
        %476 = vmatprep.subr.mxu0 0.0
        %477 = vmatpush2.msra.mxu0 0.0
        %478 = vmatprep.subr.mxu0 0.0
        %479 = vmatpush2.msra.mxu0 0.0
        %480 = vmatprep.subr.mxu0 0.0
        %481 = vmatpush2.msra.mxu0 0.0
        %482 = vmatprep.subr.mxu0 0.0
        %483 = vmatpush2.msra.mxu0 0.0
        %484 = vmatprep.subr.mxu0 0.0
        %485 = vmatpush2.msra.mxu0 0.0
        %486 = vmatprep.subr.mxu0 0.0
        %487 = vmatpush2.msra.mxu0 0.0
        %488 = vmatprep.subr.mxu0 0.0
        %489 = vmatpush2.msra.mxu0 0.0
        %490 = vmatprep.subr.mxu0 0.0
        %491 = vmatpush2.msra.mxu0 0.0
        %492 = vmatprep.subr.mxu0 0.0
        %493 = vmatpush2.msra.mxu0 0.0
        %494 = vmatprep.subr.mxu0 0.0
        %495 = vmatpush2.msra.mxu0 0.0
        %496 = vmatprep.subr.mxu0 0.0
        %497 = vmatpush2.msra.mxu0 0.0
        %498 = vmatprep.subr.mxu0 0.0
        %499 = vmatpush2.msra.mxu0 0.0
        %500 = vmatprep.subr.mxu0 0.0
        %501 = vmatpush2.msra.mxu0 0.0
        %502 = vmatprep.subr.mxu0 0.0
        %503 = vmatpush2.msra.mxu0 0.0
        %504 = vmatprep.mubr.f32.mxu0 0.0
        %505 = vmatmul.mubr.f32.gmra.mxu0 %v438
        %v506 = vpop.f32.mrf.mxu0
        %v507 = vadd.f32 %v429, %v506
        %v508 = vpop.f32.mrf.mxu0
        %v509 = vadd.f32 %v433, %v508
        %510 = vdwg.mxu0
        %v511 = vmax.f32 %v507, 0.0
        %v512 = vmax.f32 %v509, 0.0
        %v513 = vld [vmem:[%s5] sm:$0x3]
        %v515 = vlaneseq
        %v516 = vshrl.u32 %v515, 7
        %v517 = vsub.s32 0, %v516
        %v518 = vrot.slane %v513, %v517
        %v519 = vlaneseq
        %v520 = vshrl.u32 %v519, 7
        %v521 = vsub.s32 1, %v520
        %v522 = vrot.slane %v513, %v521
        %v525 = vmul.f32 %v511, %v518
        %v526 = vmul.f32 %v512, %v522
        %vm527 = vcmask 1041408
        %v528 = vsel %vm527, %v525, 0.0
        %v529 = vsel %vm527, %v526, 0.0
        %v530 = vadd.f32 %v528, %v529
        %531 = vadd.xlane.f32.xlu0 %v530
        %v532 = vpop.xlane.xlu0 %531
        %s533 = sld [smem:[#allocation2]]
        %v534 = vstv %s533
        %v535 = vadd.f32 %v532, %v534
        %v537 = vlaneseq
        %v538 = vshrl.u32 %v537, 7
        %v539 = vsub.s32 %v329, %v538
        %v540 = vrot.slane %v535, %v539
        %vm542 = vcmask 8192
        %543 = vst.msk [vmem:[%s289] sm:$0x1] %vm542, %v540
        %s544 = sand.u32 %s183, 1
        %s545 = scalar_lea.sflag [#allocation5], %s544
        %s546 = sand.u32 %s183, 1
        %s547 = scalar_lea.vmem [#allocation6], %s546
        // Predicated region
        $region53: #{tpu_custom_call.1} parent=47 // pred_check
          %p548 = pneg %p193
        $region54: #{tpu_custom_call.1} parent=47 // pred_check_branch
          %550 = sbr.rel (%p548) target = $region56
        $region55: #{tpu_custom_call.1} parent=47 // pred_region
          %s552 = ssub.s32 16, 16
          %553 = vsyncadd %s545, %s552
          %s554 = smul.addr %s23, 16
          %s555 = scalar_lea.hbm %s7, %s554
          %s557 = sshll.u32 %s547, 4
          %s558 = int_to_ptr.vmem [resolvable:$true] %s557
          %560 = dma.vmem_to_hbm [thread:$0]  %s558, 16, %s555, %s545
        $region56: #{tpu_custom_call.1} parent=47 // pred_fallthru
          _
      $region48: #{tpu_custom_call.1} parent=5 // pred_fallthru
        _
      %p561 = scmp.le.s32.totalorder 2, %s18
      // Predicated region
      $region57: #{tpu_custom_call.1} parent=5 // pred_check
        %p562 = pneg %p561
      $region58: #{tpu_custom_call.1} parent=5 // pred_check_branch
        %564 = sbr.rel (%p562) target = $region60
      $region59: #{tpu_custom_call.1} parent=5 // pred_region
        %s565 = ssub.s32 %s18, 2
        // Predicated region
        $region61: #{tpu_custom_call.1} parent=59 // pred_check
          %p566 = pneg %p199
        $region62: #{tpu_custom_call.1} parent=59 // pred_check_branch
          %568 = sbr.rel (%p566) target = $region64
        $region63: #{tpu_custom_call.1} parent=59 // pred_region
          %s569 = sand.u32 %s184, 1
          %s570 = scalar_lea.sflag [#allocation5], %s569
          %s571 = sand.u32 %s184, 1
          %s572 = scalar_lea.vmem [#allocation6], %s571
          %573 = dma.done %s570, 16
        $region64: #{tpu_custom_call.1} parent=59 // pred_fallthru
          _
      $region60: #{tpu_custom_call.1} parent=5 // pred_fallthru
        _
    $region6: #{tpu_custom_call.1} parent=1 // loop_footer
      %s22 = sadd.s32 1, %s18
    $region7: #{tpu_custom_call.1} parent=1 // loop_footer_branch
      %17 = sbr.rel target = $region3
    $region8: #{tpu_custom_call.1} parent=1 // loop_exit
      _
    %574 = vsyncpa [#allocation4], 1
    %s575 = scalar_lea.sflag [#allocation4], 1
    %576 = vsyncpa %s575, 1
    %577 = vsyncpa [#allocation5], 1
    %s578 = scalar_lea.sflag [#allocation5], 1
    %579 = vsyncpa %s578, 1

</llo_original>
